<compile_context>
chip_gen: v7x
topology: tpu7x:2x2x1
jax: 0.10.0
libtpu: 0.0.40
codegen_flags: <defaults>
</compile_context>

<pallas_src>
import functools

import jax
import jax.numpy as jnp
from jax.experimental import pallas as pl
from jax.experimental.pallas import tpu as pltpu


def critic_drr_kernel(x_ref, w1_ref, p_ref, o_ref):
    """x: (TB, D), w1: (D, H), p: (3, H) = [b1; w2_row; [b2,0..]] -> o: (TB, 1)."""
    # Layer 1 on the MXU: single matmul over the fused (state|action) features.
    h = jnp.dot(x_ref[...], w1_ref[...], preferred_element_type=jnp.float32)
    h = h + p_ref[0:1, :]                      # + b1, (1,H) -> (TB,H) broadcast
    h = jnp.maximum(h, 0.0)                    # ReLU
    # Layer 2 (H -> 1) on the VPU/XLU: broadcast-mul + lane reduce instead of a
    # second MXU push/drain for a 1-column result.
    out = jnp.sum(h * p_ref[1:2, :], axis=-1, keepdims=True)   # (TB, 1)
    o_ref[...] = (out + p_ref[2:3, 0:1]).astype(o_ref.dtype)   # + b2


def prepare_params(w1, b1, w2, b2):
    """One-time packing of parameters (call at init, NOT per forward).

    w1: (D, H), b1: (H,), w2: (H, 1), b2: (1,)
    Returns (w1, packed) with packed = (3, H):
      row 0 = b1, row 1 = w2[:, 0], row 2 = [b2, 0, ..., 0].
    """
    H = w1.shape[1]
    packed = jnp.zeros((3, H), jnp.float32)
    packed = packed.at[0, :].set(b1.astype(jnp.float32))
    packed = packed.at[1, :].set(w2[:, 0].astype(jnp.float32))
    packed = packed.at[2, 0].set(b2.reshape(()).astype(jnp.float32))
    return jnp.asarray(w1, jnp.float32), packed


def _round_up(x, m):
    return ((x + m - 1) // m) * m


@functools.partial(jax.jit, static_argnames=("tile_b",))
def critic_drr_forward(state, action, w1, packed, *, tile_b=512):
    """state: (B, S), action: (B, A); w1: (S+A, H); packed: (3, H)."""
    B = state.shape[0]
    D, H = w1.shape

    # Fused concat: one activation array, one matmul operand, one DMA stream.
    x = jnp.concatenate([state, action], axis=1).astype(jnp.float32)  # (B, D)

    # Tile the batch; pad to a multiple of the row tile (sublane-aligned).
    tb = min(tile_b, _round_up(B, 8))
    pad = (-B) % tb
    if pad:
        x = jnp.pad(x, ((0, pad), (0, 0)))
    bp = B + pad

    # Advisory cost hint for the XLA scheduler around the custom call.
    cost = pl.CostEstimate(
        flops=2 * bp * D * H + 2 * bp * H,
        transcendentals=0,
        bytes_accessed=(bp * D + D * H + 3 * H + bp) * 4,
    )

    out = pl.pallas_call(
        critic_drr_kernel,
        out_shape=jax.ShapeDtypeStruct((bp, 1), jnp.float32),
        grid=(bp // tb,),
        in_specs=[
            pl.BlockSpec((tb, D), lambda i: (i, 0)),   # activation row tile
            pl.BlockSpec((D, H), lambda i: (0, 0)),    # W1 (resident, replicated)
            pl.BlockSpec((3, H), lambda i: (0, 0)),    # packed b1 / w2_row / b2
        ],
        out_specs=pl.BlockSpec((tb, 1), lambda i: (i, 0)),
        compiler_params=pltpu.CompilerParams(
            dimension_semantics=("parallel",)),        # dual-TC on v7x / megacore
        cost_estimate=cost,
    )(x, w1, packed)
    return out[:B]


def kaiming_uniform(key, fan_in, fan_out):
    # nn.init.kaiming_uniform_ (a=0): bound = sqrt(6 / fan_in)
    bound = jnp.sqrt(6.0 / fan_in)
    return jax.random.uniform(key, (fan_in, fan_out), jnp.float32,
                              minval=-bound, maxval=bound)


if __name__ == "__main__":
    # Small, forward-consistent shapes.
    B = 8                # batch
    STATE_DIM = 24       # state_repr_dim
    ACTION_DIM = 8       # action_emb_dim
    HIDDEN = 32          # hidden_dim
    D = STATE_DIM + ACTION_DIM

    key = jax.random.PRNGKey(0)
    k_s, k_a, k_w1, k_b1, k_w2, k_b2 = jax.random.split(key, 6)

    state = jax.random.normal(k_s, (B, STATE_DIM), jnp.float32)
    action = jax.random.normal(k_a, (B, ACTION_DIM), jnp.float32)

    # Deterministic parameter init (kaiming_uniform weights, uniform biases as
    # in PyTorch's default Linear bias init).
    w1 = kaiming_uniform(k_w1, D, HIDDEN)                       # (D, H)
    b1 = jax.random.uniform(k_b1, (HIDDEN,), jnp.float32,
                            minval=-1.0 / jnp.sqrt(D), maxval=1.0 / jnp.sqrt(D))
    w2 = kaiming_uniform(k_w2, HIDDEN, 1)                       # (H, 1)
    b2 = jax.random.uniform(k_b2, (1,), jnp.float32,
                            minval=-1.0 / jnp.sqrt(HIDDEN),
                            maxval=1.0 / jnp.sqrt(HIDDEN))

    # One-time packing outside the hot path (avoids per-call weight slicing).
    w1_p, packed = prepare_params(w1, b1, w2, b2)

    out = critic_drr_forward(state, action, w1_p, packed)
    out = jax.block_until_ready(out)

    # Pure-JAX reference check of the same math.
    x = jnp.concatenate([state, action], axis=1)
    ref = jnp.maximum(x @ w1 + b1, 0.0) @ w2 + b2
    assert out.shape == (B, 1)
    assert jnp.allclose(out, ref, atol=1e-5, rtol=1e-5)

    # Also exercise a batch that needs padding + multiple grid tiles.
    B2 = 1000
    k_s2, k_a2 = jax.random.split(jax.random.PRNGKey(1))
    state2 = jax.random.normal(k_s2, (B2, STATE_DIM), jnp.float32)
    action2 = jax.random.normal(k_a2, (B2, ACTION_DIM), jnp.float32)
    out2 = jax.block_until_ready(
        critic_drr_forward(state2, action2, w1_p, packed))
    x2 = jnp.concatenate([state2, action2], axis=1)
    ref2 = jnp.maximum(x2 @ w1 + b1, 0.0) @ w2 + b2
    assert out2.shape == (B2, 1)
    assert jnp.allclose(out2, ref2, atol=1e-4, rtol=1e-4)

    print("KERNEL_OK")
</pallas_src>

<mosaic_0001>
module attributes {stable_mosaic.version = 11 : i64} {
  func.func @critic_drr_kernel(%arg0: i32, %arg1: memref<8x32xf32, #tpu.memory_space<vmem>>, %arg2: memref<32x32xf32, #tpu.memory_space<vmem>>, %arg3: memref<3x32xf32, #tpu.memory_space<vmem>>, %arg4: memref<8x1xf32, #tpu.memory_space<vmem>>) attributes {dimension_semantics = [#tpu.dimension_semantics<parallel>], iteration_bounds = array<i64: 1>, scalar_prefetch = 0 : i64, scratch_operands = 0 : i64, tpu.core_type = #tpu.core_type<tc>, window_params = [{transform_indices = @transform_0, window_bounds = array<i64: 8, 32>}, {pipeline_mode = #tpu.pipeline_mode<synchronous>, transform_indices = @transform_1, window_bounds = array<i64: 32, 32>}, {pipeline_mode = #tpu.pipeline_mode<synchronous>, transform_indices = @transform_2, window_bounds = array<i64: 3, 32>}, {transform_indices = @transform_3, window_bounds = array<i64: 8, 1>}]} {
    %c0 = arith.constant 0 : index
    %c0_0 = arith.constant 0 : index
    %0 = vector.load %arg1[%c0, %c0_0] : memref<8x32xf32, #tpu.memory_space<vmem>>, vector<8x32xf32>
    %c0_1 = arith.constant 0 : index
    %c0_2 = arith.constant 0 : index
    %1 = vector.load %arg2[%c0_1, %c0_2] : memref<32x32xf32, #tpu.memory_space<vmem>>, vector<32x32xf32>
    %cst = arith.constant dense<0.000000e+00> : vector<8x32xf32>
    %2 = tpu.matmul %0, %1, %cst {dimension_numbers = #tpu.dot_dimension_numbers<[1], [0], [0], [1], [0, 0, 1, 1], [], []>} : vector<8x32xf32>, vector<32x32xf32>, vector<8x32xf32> -> vector<8x32xf32>
    %c0_3 = arith.constant 0 : index
    %c0_4 = arith.constant 0 : index
    %3 = vector.load %arg3[%c0_3, %c0_4] : memref<3x32xf32, #tpu.memory_space<vmem>>, vector<1x32xf32>
    %4 = vector.broadcast %3 : vector<1x32xf32> to vector<8x32xf32>
    %5 = arith.addf %2, %4 : vector<8x32xf32>
    %cst_5 = arith.constant 0.000000e+00 : f32
    %6 = vector.broadcast %cst_5 : f32 to vector<8x32xf32>
    %7 = arith.maximumf %5, %6 : vector<8x32xf32>
    %c1 = arith.constant 1 : index
    %c0_6 = arith.constant 0 : index
    %8 = vector.load %arg3[%c1, %c0_6] : memref<3x32xf32, #tpu.memory_space<vmem>>, vector<1x32xf32>
    %9 = vector.broadcast %8 : vector<1x32xf32> to vector<8x32xf32>
    %10 = arith.mulf %7, %9 : vector<8x32xf32>
    %cst_7 = arith.constant dense<0.000000e+00> : vector<8xf32>
    %11 = vector.multi_reduction <add>, %10, %cst_7 [1] : vector<8x32xf32> to vector<8xf32>
    %12 = vector.shape_cast %11 : vector<8xf32> to vector<8x1xf32>
    %c2 = arith.constant 2 : index
    %c0_8 = arith.constant 0 : index
    %13 = vector.load %arg3[%c2, %c0_8] : memref<3x32xf32, #tpu.memory_space<vmem>>, vector<1x1xf32>
    %14 = vector.broadcast %13 : vector<1x1xf32> to vector<8x1xf32>
    %15 = arith.addf %12, %14 : vector<8x1xf32>
    %c0_9 = arith.constant 0 : index
    %c0_10 = arith.constant 0 : index
    %16 = vector.load %arg4[%c0_9, %c0_10] : memref<8x1xf32, #tpu.memory_space<vmem>>, vector<8x1xf32>
    tpu.vector_store %arg4[%c0_9, %c0_10], %15 {strides = array<i32>} : memref<8x1xf32, #tpu.memory_space<vmem>>, vector<8x1xf32>,
    return
  }
  func.func @transform_0(%arg0: i32) -> (i32, i32) {
    %c0_i32 = arith.constant 0 : i32
    %c0_i32_0 = arith.constant 0 : i32
    return %arg0, %c0_i32 : i32, i32
  }
  func.func @transform_1(%arg0: i32) -> (i32, i32) {
    %c0_i32 = arith.constant 0 : i32
    %c0_i32_0 = arith.constant 0 : i32
    %c0_i32_1 = arith.constant 0 : i32
    return %c0_i32, %c0_i32_0 : i32, i32
  }
  func.func @transform_2(%arg0: i32) -> (i32, i32) {
    %c0_i32 = arith.constant 0 : i32
    %c0_i32_0 = arith.constant 0 : i32
    %c0_i32_1 = arith.constant 0 : i32
    return %c0_i32, %c0_i32_0 : i32, i32
  }
  func.func @transform_3(%arg0: i32) -> (i32, i32) {
    %c0_i32 = arith.constant 0 : i32
    %c0_i32_0 = arith.constant 0 : i32
    return %arg0, %c0_i32 : i32, i32
  }
}

</mosaic_0001>

<llo_original>
// kernel: critic_drr_forward.1
$region0: #{critic_drr_forward.1}
  #allocation0 [shape = 'u32[]', space=smem, size = 0x4, offset = 0x4, fixed_abs, tag = 'smem constant byte address 0x4 - core index']
  #allocation1 [shape = 'u32[144,128]{1,0:T(1,128)}', space=vmem, size = 0x12000, scoped, tag = 'internal scratch']
  %s0 = inlined_call_operand.vmem [shape: f32[8,32], index: 0, kind: input, shape index: {}]
  %s1 = inlined_call_operand.hbm [shape: f32[32,32], index: 1, kind: input, shape index: {}]
  %s2 = inlined_call_operand.vmem [shape: f32[3,32], index: 2, kind: input, shape index: {}]
  %s3 = inlined_call_operand.vmem [shape: f32[8,1], index: 3, kind: output, shape index: {}]
  %s4 = sld [smem:[#allocation0]]
  $region26: #{critic_drr_forward.1} parent=0
    _
  %s6 = ssub.s32 1, %s4
  %s7 = scalar_select 0, %s6, %s4
  $region1: #{critic_drr_forward.1} parent=0
    #allocation2 [shape = 'u8[16384]{0}', space=vmem, size = 0x4000, scoped, tag = 'input window, operand 1, single buffered']
    #allocation3 [shape = 's32[1]{0}', space=sflag, size = 0x4, scoped, tag = 'scoped memory for critic_drr_forward.1']
    %8 = vsyncpa [#allocation3], 0
    // Predicated region
    $region2: #{critic_drr_forward.1} parent=1 // pred_check
      _
    $region3: #{critic_drr_forward.1} parent=1 // pred_check_branch
      %10 = sbr.rel (0) target = $region5
    $region4: #{critic_drr_forward.1} parent=1 // pred_region
      _
    $region5: #{critic_drr_forward.1} parent=1 // pred_fallthru
      _
    // Predicated region
    $region6: #{critic_drr_forward.1} parent=1 // pred_check
      _
    $region7: #{critic_drr_forward.1} parent=1 // pred_check_branch
      %12 = sbr.rel (0) target = $region9
    $region8: #{critic_drr_forward.1} parent=1 // pred_region
      %s14 = ssub.s32 512, 512
      %15 = vsyncadd [#allocation3], %s14
      %s16 = sshll.u32 [#allocation2], 4
      %s17 = int_to_ptr.vmem [resolvable:$true] %s16
      %22 = dma.hbm_to_vmem [thread:$0]  %s1, 512, %s17, [#allocation3], 128, 128, 8
    $region9: #{critic_drr_forward.1} parent=1 // pred_fallthru
      _
    // Predicated region
    $region10: #{critic_drr_forward.1} parent=1 // pred_check
      _
    $region11: #{critic_drr_forward.1} parent=1 // pred_check_branch
      %24 = sbr.rel (0) target = $region13
    $region12: #{critic_drr_forward.1} parent=1 // pred_region
      _
    $region13: #{critic_drr_forward.1} parent=1 // pred_fallthru
      _
    // Predicated region
    $region14: #{critic_drr_forward.1} parent=1 // pred_check
      _
    $region15: #{critic_drr_forward.1} parent=1 // pred_check_branch
      %26 = sbr.rel (0) target = $region17
    $region16: #{critic_drr_forward.1} parent=1 // pred_region
      %27 = dma.done [#allocation3], 512
    $region17: #{critic_drr_forward.1} parent=1 // pred_fallthru
      _
    %v28 = vld [vmem:[%s0] sm:$0xff]
    %v29 = vld [vmem:[#allocation2] sm:$0xff]
    %v30 = vld [vmem:[#allocation2 + $0x8] sm:$0xff]
    %v31 = vld [vmem:[#allocation2 + $0x10] sm:$0xff]
    %v32 = vld [vmem:[#allocation2 + $0x18] sm:$0xff]
    %v33 = vld [vmem:[%s2] sm:$0x1]
    %v34 = vlaneseq
    %v35 = vshrl.u32 %v34, 7
    %v36 = vsub.s32 0, %v35
    %v37 = vrot.slane %v33, %v36
    %vm38 = vcmask 261120
    %v40 = vsel %vm38, %v28, 0
    %42 = vmatprep.subr.mxu0 0.0
    %43 = vmatpush1.msra.mxu0 %v29
    %44 = vmatprep.subr.mxu0 0.0
    %45 = vmatpush1.msra.mxu0 %v30
    %46 = vmatprep.subr.mxu0 0.0
    %47 = vmatpush1.msra.mxu0 %v31
    %48 = vmatprep.subr.mxu0 0.0
    %49 = vmatpush1.msra.mxu0 %v32
    %50 = vmatprep.subr.mxu0 0.0
    %51 = vmatpush1.msra.mxu0 0.0
    %52 = vmatprep.subr.mxu0 0.0
    %53 = vmatpush1.msra.mxu0 0.0
    %54 = vmatprep.subr.mxu0 0.0
    %55 = vmatpush1.msra.mxu0 0.0
    %56 = vmatprep.subr.mxu0 0.0
    %57 = vmatpush1.msra.mxu0 0.0
    %58 = vmatprep.subr.mxu0 0.0
    %59 = vmatpush1.msra.mxu0 0.0
    %60 = vmatprep.subr.mxu0 0.0
    %61 = vmatpush1.msra.mxu0 0.0
    %62 = vmatprep.subr.mxu0 0.0
    %63 = vmatpush1.msra.mxu0 0.0
    %64 = vmatprep.subr.mxu0 0.0
    %65 = vmatpush1.msra.mxu0 0.0
    %66 = vmatprep.subr.mxu0 0.0
    %67 = vmatpush1.msra.mxu0 0.0
    %68 = vmatprep.subr.mxu0 0.0
    %69 = vmatpush1.msra.mxu0 0.0
    %70 = vmatprep.subr.mxu0 0.0
    %71 = vmatpush1.msra.mxu0 0.0
    %72 = vmatprep.subr.mxu0 0.0
    %73 = vmatpush1.msra.mxu0 0.0
    %74 = vmatprep.subr.mxu0 0.0
    %75 = vmatpush1.msra.mxu0 0.0
    %76 = vmatprep.subr.mxu0 0.0
    %77 = vmatpush1.msra.mxu0 0.0
    %78 = vmatprep.subr.mxu0 0.0
    %79 = vmatpush1.msra.mxu0 0.0
    %80 = vmatprep.subr.mxu0 0.0
    %81 = vmatpush1.msra.mxu0 0.0
    %82 = vmatprep.subr.mxu0 0.0
    %83 = vmatpush1.msra.mxu0 0.0
    %84 = vmatprep.subr.mxu0 0.0
    %85 = vmatpush1.msra.mxu0 0.0
    %86 = vmatprep.subr.mxu0 0.0
    %87 = vmatpush1.msra.mxu0 0.0
    %88 = vmatprep.subr.mxu0 0.0
    %89 = vmatpush1.msra.mxu0 0.0
    %90 = vmatprep.subr.mxu0 0.0
    %91 = vmatpush1.msra.mxu0 0.0
    %92 = vmatprep.subr.mxu0 0.0
    %93 = vmatpush1.msra.mxu0 0.0
    %94 = vmatprep.subr.mxu0 0.0
    %95 = vmatpush1.msra.mxu0 0.0
    %96 = vmatprep.subr.mxu0 0.0
    %97 = vmatpush1.msra.mxu0 0.0
    %98 = vmatprep.subr.mxu0 0.0
    %99 = vmatpush1.msra.mxu0 0.0
    %100 = vmatprep.subr.mxu0 0.0
    %101 = vmatpush1.msra.mxu0 0.0
    %102 = vmatprep.subr.mxu0 0.0
    %103 = vmatpush1.msra.mxu0 0.0
    %104 = vmatprep.subr.mxu0 0.0
    %105 = vmatpush1.msra.mxu0 0.0
    %106 = vmatprep.mubr.f32.mxu0 0.0
    %107 = vmatmul.mubr.f32.gmra.mrb[0].mxu0 %v40
    %v108 = vpop.f32.mrb[0].mxu0
    %v109 = vadd.f32 %v37, %v108
    %v110 = vpop.f32.mrb[0].mxu0
    %111 = vdwg.mxu0
    %v112 = vmax.f32 %v109, 0.0
    %v113 = vld [vmem:[%s2 + $0x1] sm:$0x1]
    %v114 = vlaneseq
    %v115 = vshrl.u32 %v114, 7
    %v116 = vsub.s32 0, %v115
    %v117 = vrot.slane %v113, %v116
    %v118 = vmul.f32 %v112, %v117
    %v119 = vsel %vm38, %v118, 0.0
    %120 = vadd.xlane.f32.xlu0 %v119
    %v121 = vpop.xlane.xlu0 %120
    %v122 = vld [vmem:[%s2 + $0x2] sm:$0x1]
    %v123 = vlaneseq
    %v124 = vshrl.u32 %v123, 7
    %v125 = vsub.s32 0, %v124
    %v126 = vrot.slane %v122, %v125
    %v127 = vadd.f32 %v121, %v126
    %vm128 = vcmask 7168
    %129 = vst.msk [vmem:[%s3] sm:$0xff] %vm128, %v127
    // Predicated region
    $region18: #{critic_drr_forward.1} parent=1 // pred_check
      _
    $region19: #{critic_drr_forward.1} parent=1 // pred_check_branch
      %131 = sbr.rel (0) target = $region21
    $region20: #{critic_drr_forward.1} parent=1 // pred_region
      _
    $region21: #{critic_drr_forward.1} parent=1 // pred_fallthru
      _
    // Predicated region
    $region22: #{critic_drr_forward.1} parent=1 // pred_check
      _
    $region23: #{critic_drr_forward.1} parent=1 // pred_check_branch
      %133 = sbr.rel (0) target = $region25
    $region24: #{critic_drr_forward.1} parent=1 // pred_region
      _
    $region25: #{critic_drr_forward.1} parent=1 // pred_fallthru
      _
    %134 = vsyncpa [#allocation3], 1

</llo_original>
